<compile_context>
chip_gen: v5e
topology: v5e:2x2
jax: 0.10.0
libtpu: 0.0.40
codegen_flags: <defaults>
</compile_context>

<pallas_src>
import jax
import jax.numpy as jnp
from jax.experimental import pallas as pl
from jax.experimental.pallas import tpu as pltpu


def rpmlp_kernel(z_ref, w1_ref, b1_ref, w2_ref, b2_ref, w3_ref, b3_ref, o_ref):
    # fc1: bf16 MXU matmul, f32 accumulation; bias + ReLU in f32 on the VPU.
    h = jnp.dot(z_ref[...], w1_ref[...], preferred_element_type=jnp.float32)
    h = jnp.maximum(h + b1_ref[...], 0.0)

    # fc2: bf16 MXU matmul, f32 accumulation; bias + ReLU in f32 on the VPU.
    h = jnp.dot(h.astype(jnp.bfloat16), w2_ref[...], preferred_element_type=jnp.float32)
    h = jnp.maximum(h + b2_ref[...], 0.0)

    # fc3 (out_features == 1): VPU multiply + lane (XLU) reduction instead of an N=1 MXU matmul.
    # w3_ref is the (1, 256) row-vector form of the PyTorch (1, 256) fc3 weight.
    out = jnp.sum(h * w3_ref[...], axis=-1, keepdims=True) + b3_ref[0]
    o_ref[...] = out.astype(o_ref.dtype)


def _round_up(x, m):
    return ((x + m - 1) // m) * m


def _pick_batch_tile(batch):
    # Split the batch into ceil(B/1024) near-equal, 8-aligned tiles.  Big tiles amortize the
    # ~0.35 us per-grid-step overhead; near-equal split keeps padding waste small when B is not
    # a multiple of 1024.
    n_tiles = max(1, -(-batch // 1024))
    return _round_up(-(-batch // n_tiles), 8)


def rpmlp_forward(z, w1, b1, w2, b2, w3, b3, *, tb=None):
    """z: (B, latent) f32; w1: (latent,256); b1: (1,256); w2: (256,256); b2: (1,256);
    w3: (1,256); b3: (1,).  Returns (B, 1) f32, matching nn.Linear semantics."""
    B, latent = z.shape
    hidden = w1.shape[1]

    if tb is None:
        tb = _pick_batch_tile(B)
    b_pad = _round_up(B, tb)
    if b_pad != B:
        z = jnp.pad(z, ((0, b_pad - B), (0, 0)))
    grid = (b_pad // tb,)

    # bf16 inputs for the two big matmuls (halves weight/activation DMA bytes); everything
    # elementwise and the fc3 reduction stay f32.
    z_bf16 = z.astype(jnp.bfloat16)
    w1_bf16 = w1.astype(jnp.bfloat16)
    w2_bf16 = w2.astype(jnp.bfloat16)

    const = lambda shape: pl.BlockSpec(shape, lambda i: (0,) * len(shape))  # VMEM-resident

    flops = 2 * b_pad * (latent * hidden + hidden * hidden + hidden)
    bytes_accessed = (
        z_bf16.size * 2 + w1_bf16.size * 2 + w2_bf16.size * 2
        + b1.size * 4 + b2.size * 4 + w3.size * 4 + b3.size * 4
        + b_pad * 4
    )

    out = pl.pallas_call(
        rpmlp_kernel,
        out_shape=jax.ShapeDtypeStruct((b_pad, 1), jnp.float32),
        grid_spec=pltpu.PrefetchScalarGridSpec(
            num_scalar_prefetch=0,
            grid=grid,
            in_specs=[
                pl.BlockSpec((tb, latent), lambda i: (i, 0)),   # z tile, pipelined over batch
                const(w1_bf16.shape),                           # weights / biases resident
                const(b1.shape),
                const(w2_bf16.shape),
                const(b2.shape),
                const(w3.shape),
                pl.BlockSpec(memory_space=pltpu.MemorySpace.SMEM),  # scalar b3 in SMEM
            ],
            out_specs=pl.BlockSpec((tb, 1), lambda i: (i, 0)),
        ),
        compiler_params=pltpu.CompilerParams(
            dimension_semantics=("parallel",),  # shards batch tiles across TCs on v7x megacore
        ),
        cost_estimate=pl.CostEstimate(
            flops=flops, transcendentals=0, bytes_accessed=bytes_accessed
        ),
    )(z_bf16, w1_bf16, b1, w2_bf16, b2, w3, b3)

    return out[:B] if b_pad != B else out


def init_params(latent_dim, key):
    # Deterministic synthetic init (PyTorch-style uniform bounds).
    # w1/w2 stored as (in, out) so the kernel computes h @ W + b (== x @ W.T + b in PyTorch).
    # w3 stored as a (1, 256) row vector (the fc3 weight of shape (1, 256) in PyTorch),
    # b3 stored as shape (1,) so it can live in SMEM.
    k1, k2, k3, k4, k5, k6 = jax.random.split(key, 6)

    def lin(kw, kb, fan_in, fan_out):
        bound = 1.0 / (fan_in ** 0.5)
        w = jax.random.uniform(kw, (fan_in, fan_out), jnp.float32, -bound, bound)
        b = jax.random.uniform(kb, (1, fan_out), jnp.float32, -bound, bound)
        return w, b

    w1, b1 = lin(k1, k2, latent_dim, 256)
    w2, b2 = lin(k3, k4, 256, 256)
    bound3 = 1.0 / (256 ** 0.5)
    w3 = jax.random.uniform(k5, (1, 256), jnp.float32, -bound3, bound3)
    b3 = jax.random.uniform(k6, (1,), jnp.float32, -bound3, bound3)
    return w1, b1, w2, b2, w3, b3


def rpmlp_reference(z, w1, b1, w2, b2, w3, b3):
    # Same math as the kernel (bf16 matmuls with f32 accumulation) in plain JAX.
    h = jnp.dot(z.astype(jnp.bfloat16), w1.astype(jnp.bfloat16),
                preferred_element_type=jnp.float32)
    h = jnp.maximum(h + b1, 0.0)
    h = jnp.dot(h.astype(jnp.bfloat16), w2.astype(jnp.bfloat16),
                preferred_element_type=jnp.float32)
    h = jnp.maximum(h + b2, 0.0)
    return jnp.sum(h * w3, axis=-1, keepdims=True) + b3[0]


if __name__ == "__main__":
    latent_dim = 32
    batch = 8

    key = jax.random.PRNGKey(0)
    kz, kp = jax.random.split(key)
    z = jax.random.normal(kz, (batch, latent_dim), jnp.float32)
    params = init_params(latent_dim, kp)

    # Small-batch path (single tiny tile).
    out = rpmlp_forward(z, *params)
    out = jax.block_until_ready(out)
    ref = rpmlp_reference(z, *params)
    assert out.shape == (batch, 1)
    assert jnp.allclose(out, ref, atol=1e-3, rtol=1e-3), "mismatch vs reference (batch=8)"

    # Multi-tile path with batch padding (exercises grid > 1 and the pad/slice logic).
    batch2 = 200
    z2 = jax.random.normal(jax.random.PRNGKey(1), (batch2, latent_dim), jnp.float32)
    out2 = jax.block_until_ready(rpmlp_forward(z2, *params, tb=64))
    ref2 = rpmlp_reference(z2, *params)
    assert out2.shape == (batch2, 1)
    assert jnp.allclose(out2, ref2, atol=1e-3, rtol=1e-3), "mismatch vs reference (batch=200)"

    print("KERNEL_OK")
</pallas_src>

<mosaic_0001>
module attributes {stable_mosaic.version = 11 : i64} {
  func.func @rpmlp_kernel(%arg0: i32, %arg1: memref<8x32xbf16, #tpu.memory_space<vmem>>, %arg2: memref<32x256xbf16, #tpu.memory_space<vmem>>, %arg3: memref<1x256xf32, #tpu.memory_space<vmem>>, %arg4: memref<256x256xbf16, #tpu.memory_space<vmem>>, %arg5: memref<1x256xf32, #tpu.memory_space<vmem>>, %arg6: memref<1x256xf32, #tpu.memory_space<vmem>>, %arg7: memref<1xf32, #tpu.memory_space<smem>>, %arg8: memref<8x1xf32, #tpu.memory_space<vmem>>) attributes {dimension_semantics = [#tpu.dimension_semantics<parallel>], iteration_bounds = array<i64: 1>, scalar_prefetch = 0 : i64, scratch_operands = 0 : i64, tpu.core_type = #tpu.core_type<tc>, window_params = [{transform_indices = @transform_0, window_bounds = array<i64: 8, 32>}, {pipeline_mode = #tpu.pipeline_mode<synchronous>, transform_indices = @transform_1, window_bounds = array<i64: 32, 256>}, {pipeline_mode = #tpu.pipeline_mode<synchronous>, transform_indices = @transform_2, window_bounds = array<i64: 1, 256>}, {pipeline_mode = #tpu.pipeline_mode<synchronous>, transform_indices = @transform_3, window_bounds = array<i64: 256, 256>}, {pipeline_mode = #tpu.pipeline_mode<synchronous>, transform_indices = @transform_4, window_bounds = array<i64: 1, 256>}, {pipeline_mode = #tpu.pipeline_mode<synchronous>, transform_indices = @transform_5, window_bounds = array<i64: 1, 256>}, {transform_indices = @transform_6, window_bounds = array<i64: 1>}, {transform_indices = @transform_7, window_bounds = array<i64: 8, 1>}]} {
    %c0 = arith.constant 0 : index
    %c0_0 = arith.constant 0 : index
    %0 = vector.load %arg1[%c0, %c0_0] : memref<8x32xbf16, #tpu.memory_space<vmem>>, vector<8x32xbf16>
    %c0_1 = arith.constant 0 : index
    %c0_2 = arith.constant 0 : index
    %1 = vector.load %arg2[%c0_1, %c0_2] : memref<32x256xbf16, #tpu.memory_space<vmem>>, vector<32x256xbf16>
    %cst = arith.constant dense<0.000000e+00> : vector<8x256xf32>
    %2 = tpu.matmul %0, %1, %cst {dimension_numbers = #tpu.dot_dimension_numbers<[1], [0], [0], [1], [0, 0, 1, 1], [], []>} : vector<8x32xbf16>, vector<32x256xbf16>, vector<8x256xf32> -> vector<8x256xf32>
    %c0_3 = arith.constant 0 : index
    %c0_4 = arith.constant 0 : index
    %3 = vector.load %arg3[%c0_3, %c0_4] : memref<1x256xf32, #tpu.memory_space<vmem>>, vector<1x256xf32>
    %4 = vector.broadcast %3 : vector<1x256xf32> to vector<8x256xf32>
    %5 = arith.addf %2, %4 : vector<8x256xf32>
    %cst_5 = arith.constant 0.000000e+00 : f32
    %6 = vector.broadcast %cst_5 : f32 to vector<8x256xf32>
    %7 = arith.maximumf %5, %6 : vector<8x256xf32>
    %8 = arith.truncf %7 : vector<8x256xf32> to vector<8x256xbf16>
    %c0_6 = arith.constant 0 : index
    %c0_7 = arith.constant 0 : index
    %9 = vector.load %arg4[%c0_6, %c0_7] : memref<256x256xbf16, #tpu.memory_space<vmem>>, vector<256x256xbf16>
    %cst_8 = arith.constant dense<0.000000e+00> : vector<8x256xf32>
    %10 = tpu.matmul %8, %9, %cst_8 {dimension_numbers = #tpu.dot_dimension_numbers<[1], [0], [0], [1], [0, 0, 1, 1], [], []>} : vector<8x256xbf16>, vector<256x256xbf16>, vector<8x256xf32> -> vector<8x256xf32>
    %c0_9 = arith.constant 0 : index
    %c0_10 = arith.constant 0 : index
    %11 = vector.load %arg5[%c0_9, %c0_10] : memref<1x256xf32, #tpu.memory_space<vmem>>, vector<1x256xf32>
    %12 = vector.broadcast %11 : vector<1x256xf32> to vector<8x256xf32>
    %13 = arith.addf %10, %12 : vector<8x256xf32>
    %cst_11 = arith.constant 0.000000e+00 : f32
    %14 = vector.broadcast %cst_11 : f32 to vector<8x256xf32>
    %15 = arith.maximumf %13, %14 : vector<8x256xf32>
    %c0_12 = arith.constant 0 : index
    %c0_13 = arith.constant 0 : index
    %16 = vector.load %arg6[%c0_12, %c0_13] : memref<1x256xf32, #tpu.memory_space<vmem>>, vector<1x256xf32>
    %17 = vector.broadcast %16 : vector<1x256xf32> to vector<8x256xf32>
    %18 = arith.mulf %15, %17 : vector<8x256xf32>
    %cst_14 = arith.constant dense<0.000000e+00> : vector<8xf32>
    %19 = vector.multi_reduction <add>, %18, %cst_14 [1] : vector<8x256xf32> to vector<8xf32>
    %20 = vector.shape_cast %19 : vector<8xf32> to vector<8x1xf32>
    %c0_15 = arith.constant 0 : index
    %21 = memref.load %arg7[%c0_15] : memref<1xf32, #tpu.memory_space<smem>>
    %22 = vector.broadcast %21 : f32 to vector<8x1xf32>
    %23 = arith.addf %20, %22 : vector<8x1xf32>
    %c0_16 = arith.constant 0 : index
    %c0_17 = arith.constant 0 : index
    %24 = vector.load %arg8[%c0_16, %c0_17] : memref<8x1xf32, #tpu.memory_space<vmem>>, vector<8x1xf32>
    tpu.vector_store %arg8[%c0_16, %c0_17], %23 {strides = array<i32>} : memref<8x1xf32, #tpu.memory_space<vmem>>, vector<8x1xf32>,
    return
  }
  func.func @transform_0(%arg0: i32) -> (i32, i32) {
    %c0_i32 = arith.constant 0 : i32
    %c0_i32_0 = arith.constant 0 : i32
    return %arg0, %c0_i32 : i32, i32
  }
  func.func @transform_1(%arg0: i32) -> (i32, i32) {
    %c0_i32 = arith.constant 0 : i32
    %c0_i32_0 = arith.constant 0 : i32
    %c0_i32_1 = arith.constant 0 : i32
    return %c0_i32, %c0_i32_0 : i32, i32
  }
  func.func @transform_2(%arg0: i32) -> (i32, i32) {
    %c0_i32 = arith.constant 0 : i32
    %c0_i32_0 = arith.constant 0 : i32
    %c0_i32_1 = arith.constant 0 : i32
    return %c0_i32, %c0_i32_0 : i32, i32
  }
  func.func @transform_3(%arg0: i32) -> (i32, i32) {
    %c0_i32 = arith.constant 0 : i32
    %c0_i32_0 = arith.constant 0 : i32
    %c0_i32_1 = arith.constant 0 : i32
    return %c0_i32, %c0_i32_0 : i32, i32
  }
  func.func @transform_4(%arg0: i32) -> (i32, i32) {
    %c0_i32 = arith.constant 0 : i32
    %c0_i32_0 = arith.constant 0 : i32
    %c0_i32_1 = arith.constant 0 : i32
    return %c0_i32, %c0_i32_0 : i32, i32
  }
  func.func @transform_5(%arg0: i32) -> (i32, i32) {
    %c0_i32 = arith.constant 0 : i32
    %c0_i32_0 = arith.constant 0 : i32
    %c0_i32_1 = arith.constant 0 : i32
    return %c0_i32, %c0_i32_0 : i32, i32
  }
  func.func @transform_6(%arg0: i32) -> i32 {
    %c0_i32 = arith.constant 0 : i32
    %c0_i32_0 = arith.constant 0 : i32
    return %c0_i32 : i32
  }
  func.func @transform_7(%arg0: i32) -> (i32, i32) {
    %c0_i32 = arith.constant 0 : i32
    %c0_i32_0 = arith.constant 0 : i32
    return %arg0, %c0_i32 : i32, i32
  }
}

</mosaic_0001>

<llo_original>
// kernel: tpu_custom_call.1
$region0: #{tpu_custom_call.1}
  #allocation0 [shape = 'u32[]', space=smem, size = 0x4, offset = 0x4, fixed_abs, tag = 'smem constant byte address 0x4 - core index']
  #allocation1 [shape = 'u32[72,128]{1,0:T(1,128)}', space=vmem, size = 0x9000, scoped, tag = 'internal scratch']
  #allocation2 [shape = 'f32[1]{0:T(128)S(6)}', space=smem, size = 0x200, scoped, tag = 'scoped memory for tpu_custom_call.1']
  %s0 = inlined_call_operand.hbm [shape: bf16[8,32], index: 0, kind: input, shape index: {}]
  %s1 = inlined_call_operand.hbm [shape: bf16[32,256], index: 1, kind: input, shape index: {}]
  %s2 = inlined_call_operand.vmem [shape: f32[1,256], index: 2, kind: input, shape index: {}]
  %s3 = inlined_call_operand.hbm [shape: bf16[256,256], index: 3, kind: input, shape index: {}]
  %s4 = inlined_call_operand.vmem [shape: f32[1,256], index: 4, kind: input, shape index: {}]
  %s5 = inlined_call_operand.vmem [shape: f32[1,256], index: 5, kind: input, shape index: {}]
  %s6 = inlined_call_operand.<no memory space> [shape: f32[1], index: 6, kind: input, shape index: {}]
  %s7 = inlined_call_operand.vmem [shape: f32[8,1], index: 7, kind: output, shape index: {}]
  %s8 = sld [smem:[#allocation0]]
  $region50: #{tpu_custom_call.1} parent=0
    _
  %s10 = ssub.s32 1, %s8
  %s11 = scalar_select 0, %s10, %s8
  %12 = sst [smem:[#allocation2]] %s6
  $region1: #{tpu_custom_call.1} parent=0
    #allocation3 [shape = 'u8[2048]{0}', space=vmem, size = 0x800, scoped, tag = 'input window, operand 0, single buffered']
    #allocation4 [shape = 's32[1]{0}', space=sflag, size = 0x4, scoped, tag = 'scoped memory for tpu_custom_call.1']
    #allocation5 [shape = 'u8[16384]{0}', space=vmem, size = 0x4000, scoped, tag = 'input window, operand 1, single buffered']
    #allocation6 [shape = 's32[1]{0}', space=sflag, size = 0x4, scoped, tag = 'scoped memory for tpu_custom_call.1']
    #allocation7 [shape = 'u8[131072]{0}', space=vmem, size = 0x20000, scoped, tag = 'input window, operand 3, single buffered']
    %13 = vsyncpa [#allocation4], 0
    %14 = vsyncpa [#allocation6], 0
    // Predicated region
    $region2: #{tpu_custom_call.1} parent=1 // pred_check
      _
    $region3: #{tpu_custom_call.1} parent=1 // pred_check_branch
      %16 = sbr.rel (0) target = $region5
    $region4: #{tpu_custom_call.1} parent=1 // pred_region
      %18 = vsyncadd [#allocation4], 0
      %s20 = sshll.u32 %s0, 4
      %s21 = int_to_ptr.hbm [resolvable:$true] %s20
      %s22 = sshll.u32 [#allocation3], 4
      %s23 = int_to_ptr.vmem [resolvable:$true] %s22
      %25 = dma.hbm_to_vmem [thread:$0]  %s21, 64, %s23, [#allocation4]
    $region5: #{tpu_custom_call.1} parent=1 // pred_fallthru
      _
    // Predicated region
    $region6: #{tpu_custom_call.1} parent=1 // pred_check
      _
    $region7: #{tpu_custom_call.1} parent=1 // pred_check_branch
      %27 = sbr.rel (0) target = $region9
    $region8: #{tpu_custom_call.1} parent=1 // pred_region
      %29 = vsyncadd [#allocation6], 0
      %s30 = sshll.u32 %s1, 4
      %s31 = int_to_ptr.hbm [resolvable:$true] %s30
      %s32 = sshll.u32 [#allocation5], 4
      %s33 = int_to_ptr.vmem [resolvable:$true] %s32
      %38 = dma.hbm_to_vmem [thread:$0]  %s31, 512, %s33, [#allocation6], 128, 128, 8
    $region9: #{tpu_custom_call.1} parent=1 // pred_fallthru
      _
    // Predicated region
    $region10: #{tpu_custom_call.1} parent=1 // pred_check
      _
    $region11: #{tpu_custom_call.1} parent=1 // pred_check_branch
      %40 = sbr.rel (0) target = $region13
    $region12: #{tpu_custom_call.1} parent=1 // pred_region
      _
    $region13: #{tpu_custom_call.1} parent=1 // pred_fallthru
      _
    // Predicated region
    $region14: #{tpu_custom_call.1} parent=1 // pred_check
      _
    $region15: #{tpu_custom_call.1} parent=1 // pred_check_branch
      %42 = sbr.rel (0) target = $region17
    $region16: #{tpu_custom_call.1} parent=1 // pred_region
      %44 = vsyncadd [#allocation6], 0
      %s45 = sshll.u32 %s3, 4
      %s46 = int_to_ptr.hbm [resolvable:$true] %s45
      %s47 = sshll.u32 [#allocation7], 4
      %s48 = int_to_ptr.vmem [resolvable:$true] %s47
      %53 = dma.hbm_to_vmem [thread:$0]  %s46, 4096, %s48, [#allocation6], 128, 128, 8
    $region17: #{tpu_custom_call.1} parent=1 // pred_fallthru
      _
    // Predicated region
    $region18: #{tpu_custom_call.1} parent=1 // pred_check
      _
    $region19: #{tpu_custom_call.1} parent=1 // pred_check_branch
      %55 = sbr.rel (0) target = $region21
    $region20: #{tpu_custom_call.1} parent=1 // pred_region
      _
    $region21: #{tpu_custom_call.1} parent=1 // pred_fallthru
      _
    // Predicated region
    $region22: #{tpu_custom_call.1} parent=1 // pred_check
      _
    $region23: #{tpu_custom_call.1} parent=1 // pred_check_branch
      %57 = sbr.rel (0) target = $region25
    $region24: #{tpu_custom_call.1} parent=1 // pred_region
      _
    $region25: #{tpu_custom_call.1} parent=1 // pred_fallthru
      _
    // Predicated region
    $region26: #{tpu_custom_call.1} parent=1 // pred_check
      _
    $region27: #{tpu_custom_call.1} parent=1 // pred_check_branch
      %59 = sbr.rel (0) target = $region29
    $region28: #{tpu_custom_call.1} parent=1 // pred_region
      _
    $region29: #{tpu_custom_call.1} parent=1 // pred_fallthru
      _
    // Predicated region
    $region30: #{tpu_custom_call.1} parent=1 // pred_check
      _
    $region31: #{tpu_custom_call.1} parent=1 // pred_check_branch
      %61 = sbr.rel (0) target = $region33
    $region32: #{tpu_custom_call.1} parent=1 // pred_region
      %63 = dma.done [#allocation4], 64
    $region33: #{tpu_custom_call.1} parent=1 // pred_fallthru
      _
    // Predicated region
    $region34: #{tpu_custom_call.1} parent=1 // pred_check
      _
    $region35: #{tpu_custom_call.1} parent=1 // pred_check_branch
      %65 = sbr.rel (0) target = $region37
    $region36: #{tpu_custom_call.1} parent=1 // pred_region
      %67 = dma.done [#allocation6], 512
    $region37: #{tpu_custom_call.1} parent=1 // pred_fallthru
      _
    // Predicated region
    $region38: #{tpu_custom_call.1} parent=1 // pred_check
      _
    $region39: #{tpu_custom_call.1} parent=1 // pred_check_branch
      %69 = sbr.rel (0) target = $region41
    $region40: #{tpu_custom_call.1} parent=1 // pred_region
      %71 = dma.done [#allocation6], 4096
    $region41: #{tpu_custom_call.1} parent=1 // pred_fallthru
      _
    %v73 = vld [vmem:[#allocation3] sm:$0xf]
    %v74 = vld [vmem:[#allocation5] sm:$0xff]
    %v75 = vld [vmem:[#allocation5 + $0x8] sm:$0xff]
    %v76 = vld [vmem:[#allocation5 + $0x10] sm:$0xff]
    %v77 = vld [vmem:[#allocation5 + $0x18] sm:$0xff]
    %v78 = vld [vmem:[%s2] sm:$0x3]
    %v80 = vperm.slane %v78, 0
    %v81 = vperm.slane %v78, 1
    %v88 = vunpack.c.l.b16 %v74
    %v89 = vunpack.c.h.b16 %v74
    %v90 = vunpack.c.l.b16 %v75
    %v91 = vunpack.c.h.b16 %v75
    %v92 = vunpack.c.l.b16 %v76
    %v93 = vunpack.c.h.b16 %v76
    %v94 = vunpack.c.l.b16 %v77
    %v95 = vunpack.c.h.b16 %v77
    %v96 = vpack.c.b16 %v90, %v88
    %v97 = vpack.c.b16 %v91, %v89
    %v98 = vpack.c.b16 %v94, %v92
    %v99 = vpack.c.b16 %v95, %v93
    %vm104 = vcmask 261120
    %v106 = vsel %vm104, %v73, 0
    %108 = vmatpush.bf16.msra.mxu0 0
    %109 = vmatpush.bf16.msra.mxu0 0
    %110 = vmatpush.bf16.msra.mxu0 0
    %111 = vmatpush.bf16.msra.mxu0 0
    %112 = vmatpush.bf16.msra.mxu0 0
    %113 = vmatpush.bf16.msra.mxu0 0
    %114 = vmatpush.bf16.msra.mxu0 %v98
    %115 = vmatpush.bf16.msra.mxu0 %v96
    %116 = vmatmul.bf16.gmra.mxu0 %v106
    %v117 = vpop.f32.mrf.mxu0
    %v118 = vadd.f32 %v80, %v117
    %v119 = vpop.f32.mrf.mxu0
    %120 = vdwg.mxu0
    %121 = vmatpush.bf16.msra.mxu0 0
    %122 = vmatpush.bf16.msra.mxu0 0
    %123 = vmatpush.bf16.msra.mxu0 0
    %124 = vmatpush.bf16.msra.mxu0 0
    %125 = vmatpush.bf16.msra.mxu0 0
    %126 = vmatpush.bf16.msra.mxu0 0
    %127 = vmatpush.bf16.msra.mxu0 %v99
    %128 = vmatpush.bf16.msra.mxu0 %v97
    %129 = vmatmul.bf16.gmra.mxu0 %v106
    %v130 = vpop.f32.mrf.mxu0
    %v131 = vadd.f32 %v81, %v130
    %v132 = vpop.f32.mrf.mxu0
    %133 = vdwg.mxu0
    %v134 = vmax.f32 %v118, 0.0
    %v135 = vmax.f32 %v131, 0.0
    %v136 = vpack.c.bf16 %v134, %v134
    %v137 = vpack.c.bf16 %v135, %v135
    %v138 = vld [vmem:[#allocation7] sm:$0xff]
    %v139 = vld [vmem:[#allocation7 + $0x8] sm:$0xff]
    %v140 = vld [vmem:[#allocation7 + $0x10] sm:$0xff]
    %v141 = vld [vmem:[#allocation7 + $0x18] sm:$0xff]
    %v142 = vld [vmem:[#allocation7 + $0x20] sm:$0xff]
    %v143 = vld [vmem:[#allocation7 + $0x28] sm:$0xff]
    %v144 = vld [vmem:[#allocation7 + $0x30] sm:$0xff]
    %v145 = vld [vmem:[#allocation7 + $0x38] sm:$0xff]
    %v146 = vld [vmem:[#allocation7 + $0x40] sm:$0xff]
    %v147 = vld [vmem:[#allocation7 + $0x48] sm:$0xff]
    %v148 = vld [vmem:[#allocation7 + $0x50] sm:$0xff]
    %v149 = vld [vmem:[#allocation7 + $0x58] sm:$0xff]
    %v150 = vld [vmem:[#allocation7 + $0x60] sm:$0xff]
    %v151 = vld [vmem:[#allocation7 + $0x68] sm:$0xff]
    %v152 = vld [vmem:[#allocation7 + $0x70] sm:$0xff]
    %v153 = vld [vmem:[#allocation7 + $0x78] sm:$0xff]
    %v154 = vld [vmem:[#allocation7 + $0x80] sm:$0xff]
    %v155 = vld [vmem:[#allocation7 + $0x88] sm:$0xff]
    %v156 = vld [vmem:[#allocation7 + $0x90] sm:$0xff]
    %v157 = vld [vmem:[#allocation7 + $0x98] sm:$0xff]
    %v158 = vld [vmem:[#allocation7 + $0xa0] sm:$0xff]
    %v159 = vld [vmem:[#allocation7 + $0xa8] sm:$0xff]
    %v160 = vld [vmem:[#allocation7 + $0xb0] sm:$0xff]
    %v161 = vld [vmem:[#allocation7 + $0xb8] sm:$0xff]
    %v162 = vld [vmem:[#allocation7 + $0xc0] sm:$0xff]
    %v163 = vld [vmem:[#allocation7 + $0xc8] sm:$0xff]
    %v164 = vld [vmem:[#allocation7 + $0xd0] sm:$0xff]
    %v165 = vld [vmem:[#allocation7 + $0xd8] sm:$0xff]
    %v166 = vld [vmem:[#allocation7 + $0xe0] sm:$0xff]
    %v167 = vld [vmem:[#allocation7 + $0xe8] sm:$0xff]
    %v168 = vld [vmem:[#allocation7 + $0xf0] sm:$0xff]
    %v169 = vld [vmem:[#allocation7 + $0xf8] sm:$0xff]
    %v170 = vld [vmem:[%s4] sm:$0x3]
    %v172 = vperm.slane %v170, 0
    %v173 = vperm.slane %v170, 1
    %v208 = vunpack.c.l.b16 %v138
    %v209 = vunpack.c.h.b16 %v138
    %v210 = vunpack.c.l.b16 %v139
    %v211 = vunpack.c.h.b16 %v139
    %v212 = vunpack.c.l.b16 %v140
    %v213 = vunpack.c.h.b16 %v140
    %v214 = vunpack.c.l.b16 %v141
    %v215 = vunpack.c.h.b16 %v141
    %v216 = vunpack.c.l.b16 %v142
    %v217 = vunpack.c.h.b16 %v142
    %v218 = vunpack.c.l.b16 %v143
    %v219 = vunpack.c.h.b16 %v143
    %v220 = vunpack.c.l.b16 %v144
    %v221 = vunpack.c.h.b16 %v144
    %v222 = vunpack.c.l.b16 %v145
    %v223 = vunpack.c.h.b16 %v145
    %v224 = vunpack.c.l.b16 %v146
    %v225 = vunpack.c.h.b16 %v146
    %v226 = vunpack.c.l.b16 %v147
    %v227 = vunpack.c.h.b16 %v147
    %v228 = vunpack.c.l.b16 %v148
    %v229 = vunpack.c.h.b16 %v148
    %v230 = vunpack.c.l.b16 %v149
    %v231 = vunpack.c.h.b16 %v149
    %v232 = vunpack.c.l.b16 %v150
    %v233 = vunpack.c.h.b16 %v150
    %v234 = vunpack.c.l.b16 %v151
    %v235 = vunpack.c.h.b16 %v151
    %v236 = vunpack.c.l.b16 %v152
    %v237 = vunpack.c.h.b16 %v152
    %v238 = vunpack.c.l.b16 %v153
    %v239 = vunpack.c.h.b16 %v153
    %v240 = vunpack.c.l.b16 %v154
    %v241 = vunpack.c.h.b16 %v154
    %v242 = vunpack.c.l.b16 %v155
    %v243 = vunpack.c.h.b16 %v155
    %v244 = vunpack.c.l.b16 %v156
    %v245 = vunpack.c.h.b16 %v156
    %v246 = vunpack.c.l.b16 %v157
    %v247 = vunpack.c.h.b16 %v157
    %v248 = vunpack.c.l.b16 %v158
    %v249 = vunpack.c.h.b16 %v158
    %v250 = vunpack.c.l.b16 %v159
    %v251 = vunpack.c.h.b16 %v159
    %v252 = vunpack.c.l.b16 %v160
    %v253 = vunpack.c.h.b16 %v160
    %v254 = vunpack.c.l.b16 %v161
    %v255 = vunpack.c.h.b16 %v161
    %v256 = vunpack.c.l.b16 %v162
    %v257 = vunpack.c.h.b16 %v162
    %v258 = vunpack.c.l.b16 %v163
    %v259 = vunpack.c.h.b16 %v163
    %v260 = vunpack.c.l.b16 %v164
    %v261 = vunpack.c.h.b16 %v164
    %v262 = vunpack.c.l.b16 %v165
    %v263 = vunpack.c.h.b16 %v165
    %v264 = vunpack.c.l.b16 %v166
    %v265 = vunpack.c.h.b16 %v166
    %v266 = vunpack.c.l.b16 %v167
    %v267 = vunpack.c.h.b16 %v167
    %v268 = vunpack.c.l.b16 %v168
    %v269 = vunpack.c.h.b16 %v168
    %v270 = vunpack.c.l.b16 %v169
    %v271 = vunpack.c.h.b16 %v169
    %v272 = vpack.c.b16 %v210, %v208
    %v273 = vpack.c.b16 %v211, %v209
    %v274 = vpack.c.b16 %v214, %v212
    %v275 = vpack.c.b16 %v215, %v213
    %v276 = vpack.c.b16 %v218, %v216
    %v277 = vpack.c.b16 %v219, %v217
    %v278 = vpack.c.b16 %v222, %v220
    %v279 = vpack.c.b16 %v223, %v221
    %v280 = vpack.c.b16 %v226, %v224
    %v281 = vpack.c.b16 %v227, %v225
    %v282 = vpack.c.b16 %v230, %v228
    %v283 = vpack.c.b16 %v231, %v229
    %v284 = vpack.c.b16 %v234, %v232
    %v285 = vpack.c.b16 %v235, %v233
    %v286 = vpack.c.b16 %v238, %v236
    %v287 = vpack.c.b16 %v239, %v237
    %v288 = vpack.c.b16 %v242, %v240
    %v289 = vpack.c.b16 %v243, %v241
    %v290 = vpack.c.b16 %v246, %v244
    %v291 = vpack.c.b16 %v247, %v245
    %v292 = vpack.c.b16 %v250, %v248
    %v293 = vpack.c.b16 %v251, %v249
    %v294 = vpack.c.b16 %v254, %v252
    %v295 = vpack.c.b16 %v255, %v253
    %v296 = vpack.c.b16 %v258, %v256
    %v297 = vpack.c.b16 %v259, %v257
    %v298 = vpack.c.b16 %v262, %v260
    %v299 = vpack.c.b16 %v263, %v261
    %v300 = vpack.c.b16 %v266, %v264
    %v301 = vpack.c.b16 %v267, %v265
    %v302 = vpack.c.b16 %v270, %v268
    %v303 = vpack.c.b16 %v271, %v269
    %336 = vmatpush.bf16.msra.mxu0 %v286
    %337 = vmatpush.bf16.msra.mxu0 %v284
    %338 = vmatpush.bf16.msra.mxu0 %v282
    %339 = vmatpush.bf16.msra.mxu0 %v280
    %340 = vmatpush.bf16.msra.mxu0 %v278
    %341 = vmatpush.bf16.msra.mxu0 %v276
    %342 = vmatpush.bf16.msra.mxu0 %v274
    %343 = vmatpush.bf16.msra.mxu0 %v272
    %344 = vmatmul.bf16.gmra.mxu0 %v136
    %v345 = vpop.f32.mrf.mxu0
    %v346 = vadd.f32 %v172, %v345
    %v347 = vpop.f32.mrf.mxu0
    %348 = vdwg.mxu0
    %349 = vmatpush.bf16.msra.mxu0 %v302
    %350 = vmatpush.bf16.msra.mxu0 %v300
    %351 = vmatpush.bf16.msra.mxu0 %v298
    %352 = vmatpush.bf16.msra.mxu0 %v296
    %353 = vmatpush.bf16.msra.mxu0 %v294
    %354 = vmatpush.bf16.msra.mxu0 %v292
    %355 = vmatpush.bf16.msra.mxu0 %v290
    %356 = vmatpush.bf16.msra.mxu0 %v288
    %357 = vmatmul.bf16.gmra.mxu0 %v137
    %v358 = vpop.f32.mrf.mxu0
    %v359 = vadd.f32 %v346, %v358
    %v360 = vpop.f32.mrf.mxu0
    %361 = vdwg.mxu0
    %362 = vmatpush.bf16.msra.mxu0 %v287
    %363 = vmatpush.bf16.msra.mxu0 %v285
    %364 = vmatpush.bf16.msra.mxu0 %v283
    %365 = vmatpush.bf16.msra.mxu0 %v281
    %366 = vmatpush.bf16.msra.mxu0 %v279
    %367 = vmatpush.bf16.msra.mxu0 %v277
    %368 = vmatpush.bf16.msra.mxu0 %v275
    %369 = vmatpush.bf16.msra.mxu0 %v273
    %370 = vmatmul.bf16.gmra.mxu0 %v136
    %v371 = vpop.f32.mrf.mxu0
    %v372 = vadd.f32 %v173, %v371
    %v373 = vpop.f32.mrf.mxu0
    %374 = vdwg.mxu0
    %375 = vmatpush.bf16.msra.mxu0 %v303
    %376 = vmatpush.bf16.msra.mxu0 %v301
    %377 = vmatpush.bf16.msra.mxu0 %v299
    %378 = vmatpush.bf16.msra.mxu0 %v297
    %379 = vmatpush.bf16.msra.mxu0 %v295
    %380 = vmatpush.bf16.msra.mxu0 %v293
    %381 = vmatpush.bf16.msra.mxu0 %v291
    %382 = vmatpush.bf16.msra.mxu0 %v289
    %383 = vmatmul.bf16.gmra.mxu0 %v137
    %v384 = vpop.f32.mrf.mxu0
    %v385 = vadd.f32 %v372, %v384
    %v386 = vpop.f32.mrf.mxu0
    %387 = vdwg.mxu0
    %v388 = vmax.f32 %v359, 0.0
    %v389 = vmax.f32 %v385, 0.0
    %v390 = vld [vmem:[%s5] sm:$0x3]
    %v392 = vperm.slane %v390, 0
    %v393 = vperm.slane %v390, 1
    %v396 = vmul.f32 %v388, %v392
    %v397 = vmul.f32 %v389, %v393
    %v398 = vadd.f32 %v396, %v397
    %399 = vadd.xlane.f32.xlu0 %v398
    %v400 = vpop.xlane.xlu0 %399
    %s401 = sld [smem:[#allocation2]]
    %v402 = vstv %s401
    %v403 = vadd.f32 %v400, %v402
    %vm404 = vcmask 7168
    %405 = vst.msk [vmem:[%s7] sm:$0xff] %vm404, %v403
    // Predicated region
    $region42: #{tpu_custom_call.1} parent=1 // pred_check
      _
    $region43: #{tpu_custom_call.1} parent=1 // pred_check_branch
      %407 = sbr.rel (0) target = $region45
    $region44: #{tpu_custom_call.1} parent=1 // pred_region
      _
    $region45: #{tpu_custom_call.1} parent=1 // pred_fallthru
      _
    // Predicated region
    $region46: #{tpu_custom_call.1} parent=1 // pred_check
      _
    $region47: #{tpu_custom_call.1} parent=1 // pred_check_branch
      %409 = sbr.rel (0) target = $region49
    $region48: #{tpu_custom_call.1} parent=1 // pred_region
      _
    $region49: #{tpu_custom_call.1} parent=1 // pred_fallthru
      _
    %410 = vsyncpa [#allocation4], 1
    %411 = vsyncpa [#allocation6], 1

</llo_original>
